<compile_context>
chip_gen: v5e
topology: v5e:2x2
jax: 0.10.0
libtpu: 0.0.40
codegen_flags: <defaults>
</compile_context>

<pallas_src>
import functools

import jax
import jax.numpy as jnp
from jax.experimental import pallas as pl
from jax.experimental.pallas import tpu as pltpu


def _round_up(n: int, m: int) -> int:
    return ((n + m - 1) // m) * m


def skill_policy_kernel(x_ref, w1_ref, b1_ref, w2_ref, b2_ref, o_ref):
    # Hidden layer: x @ W1 + b1, ReLU.  Cast activations to the weight dtype
    # (no-op for f32 weights, enables bf16 MXU path), accumulate in f32.
    w1 = w1_ref[...]
    h = jnp.dot(x_ref[...].astype(w1.dtype), w1,
                preferred_element_type=jnp.float32)
    h = jnp.maximum(h + b1_ref[...].astype(jnp.float32), 0.0)  # (TB, H) + (1, H)

    # Output layer: h @ W2 + b2 -> logits (lane-padded to S_pad columns).
    w2 = w2_ref[...]
    logits = jnp.dot(h.astype(w2.dtype), w2,
                     preferred_element_type=jnp.float32)
    logits = logits + b2_ref[...].astype(jnp.float32)          # (TB, S_pad) + (1, S_pad)
    o_ref[...] = logits.astype(o_ref.dtype)


@functools.partial(jax.jit, static_argnames=("block_b",))
def skill_policy_forward(memory_emb, w1, b1, w2, b2, *, block_b=256):
    """memory_emb: (B, H); returns logits (B, skill_dim)."""
    B, H = memory_emb.shape
    S = w2.shape[1]
    out_dtype = memory_emb.dtype

    # --- lane-dense output: pad skill dim up to a multiple of 128 lanes. ---
    S_pad = _round_up(max(S, 1), 128)
    w2_p = jnp.zeros((H, S_pad), w2.dtype).at[:, :S].set(w2)
    b2_p = jnp.zeros((1, S_pad), b2.dtype).at[0, :S].set(b2)
    b1_2d = b1.reshape(1, H)

    # --- batch tiling: TB multiple of 16 (sublane-legal for f32 and bf16). ---
    tb = min(_round_up(block_b, 16), _round_up(B, 16))
    B_pad = _round_up(B, tb)
    x = memory_emb
    if B_pad != B:
        x = jnp.zeros((B_pad, H), memory_emb.dtype).at[:B, :].set(memory_emb)

    grid = (pl.cdiv(B_pad, tb),)

    # NOTE: if hidden_size ever grows large (H >= ~2K f32), add a K-tiling
    # grid axis ("arbitrary", accumulator + pl.when) and/or raise
    # vmem_limit_bytes so the resident (H, H) W1 block fits VMEM (v7x: 64 MiB).
    out = pl.pallas_call(
        skill_policy_kernel,
        out_shape=jax.ShapeDtypeStruct((B_pad, S_pad), out_dtype),
        grid=grid,
        in_specs=[
            pl.BlockSpec((tb, H), lambda i: (i, 0)),      # x: tiled over batch
            pl.BlockSpec((H, H), lambda i: (0, 0)),       # W1: VMEM-resident
            pl.BlockSpec((1, H), lambda i: (0, 0)),       # b1
            pl.BlockSpec((H, S_pad), lambda i: (0, 0)),   # W2 (lane-padded)
            pl.BlockSpec((1, S_pad), lambda i: (0, 0)),   # b2 (lane-padded)
        ],
        out_specs=pl.BlockSpec((tb, S_pad), lambda i: (i, 0)),
        compiler_params=pltpu.CompilerParams(
            dimension_semantics=("parallel",)),           # megacore / v7x 2-TC
    )(x, w1, b1_2d, w2_p, b2_p)

    return out[:B, :S]


def init_skill_policy_params(key, hidden_size, skill_dim, dtype=jnp.float32):
    """Deterministic init mimicking utils.weight_init (orthogonal W, zero b).

    Weights are stored (in_features, out_features) for the kernel's x @ W
    convention (PyTorch Linear stores (out, in); we transpose after init).
    Pass dtype=jnp.bfloat16 to store weights bf16 for the v6e/v7x MXU.
    """
    k1, k2 = jax.random.split(key)
    orth = jax.nn.initializers.orthogonal()
    w1 = orth(k1, (hidden_size, hidden_size), jnp.float32).T.astype(dtype)
    w2 = orth(k2, (skill_dim, hidden_size), jnp.float32).T.astype(dtype)
    b1 = jnp.zeros((hidden_size,), jnp.float32)
    b2 = jnp.zeros((skill_dim,), jnp.float32)
    return w1, b1, w2, b2


if __name__ == "__main__":
    hidden_size = 32
    skill_dim = 8
    batch = 2

    key = jax.random.PRNGKey(0)
    k_x, k_p, k_big = jax.random.split(key, 3)

    memory_emb = jax.random.normal(k_x, (batch, hidden_size), dtype=jnp.float32)
    w1, b1, w2, b2 = init_skill_policy_params(k_p, hidden_size, skill_dim)

    # --- f32 path, tiny batch (matches the PyTorch module's usage). ---
    logits = skill_policy_forward(memory_emb, w1, b1, w2, b2)
    jax.block_until_ready(logits)
    ref = jnp.maximum(memory_emb @ w1 + b1, 0.0) @ w2 + b2
    assert logits.shape == (batch, skill_dim)
    assert jnp.allclose(logits, ref, atol=1e-5, rtol=1e-5)

    # --- larger ragged batch: exercises the multi-tile grid + pad-and-slice. ---
    big_B = 300  # not a multiple of the 256-row batch tile
    big_x = jax.random.normal(k_big, (big_B, hidden_size), dtype=jnp.float32)
    big_logits = skill_policy_forward(big_x, w1, b1, w2, b2)
    jax.block_until_ready(big_logits)
    big_ref = jnp.maximum(big_x @ w1 + b1, 0.0) @ w2 + b2
    assert big_logits.shape == (big_B, skill_dim)
    assert jnp.allclose(big_logits, big_ref, atol=1e-4, rtol=1e-4)

    # --- bf16-weight path (v6e/v7x MXU-native), loosened tolerance. ---
    w1_bf, w2_bf = w1.astype(jnp.bfloat16), w2.astype(jnp.bfloat16)
    logits_bf = skill_policy_forward(memory_emb, w1_bf, b1, w2_bf, b2)
    jax.block_until_ready(logits_bf)
    h_ref = jnp.maximum(
        jnp.dot(memory_emb.astype(jnp.bfloat16), w1_bf,
                preferred_element_type=jnp.float32) + b1, 0.0)
    ref_bf = jnp.dot(h_ref.astype(jnp.bfloat16), w2_bf,
                     preferred_element_type=jnp.float32) + b2
    assert jnp.allclose(logits_bf, ref_bf, atol=2e-2, rtol=2e-2)

    # TODO(synk): SkillPolicy.sample (Categorical sampling / log_prob / entropy)
    # is stochastic host-side glue, not the forward hot path; kept out of the kernel.
    print("KERNEL_OK")
</pallas_src>

<mosaic_0001>
module attributes {stable_mosaic.version = 11 : i64} {
  func.func @skill_policy_kernel(%arg0: i32, %arg1: memref<16x32xf32, #tpu.memory_space<vmem>>, %arg2: memref<32x32xf32, #tpu.memory_space<vmem>>, %arg3: memref<1x32xf32, #tpu.memory_space<vmem>>, %arg4: memref<32x128xf32, #tpu.memory_space<vmem>>, %arg5: memref<1x128xf32, #tpu.memory_space<vmem>>, %arg6: memref<16x128xf32, #tpu.memory_space<vmem>>) attributes {dimension_semantics = [#tpu.dimension_semantics<parallel>], iteration_bounds = array<i64: 1>, scalar_prefetch = 0 : i64, scratch_operands = 0 : i64, tpu.core_type = #tpu.core_type<tc>, window_params = [{transform_indices = @transform_0, window_bounds = array<i64: 16, 32>}, {pipeline_mode = #tpu.pipeline_mode<synchronous>, transform_indices = @transform_1, window_bounds = array<i64: 32, 32>}, {pipeline_mode = #tpu.pipeline_mode<synchronous>, transform_indices = @transform_2, window_bounds = array<i64: 1, 32>}, {pipeline_mode = #tpu.pipeline_mode<synchronous>, transform_indices = @transform_3, window_bounds = array<i64: 32, 128>}, {pipeline_mode = #tpu.pipeline_mode<synchronous>, transform_indices = @transform_4, window_bounds = array<i64: 1, 128>}, {transform_indices = @transform_5, window_bounds = array<i64: 16, 128>}]} {
    %c0 = arith.constant 0 : index
    %c0_0 = arith.constant 0 : index
    %0 = vector.load %arg2[%c0, %c0_0] : memref<32x32xf32, #tpu.memory_space<vmem>>, vector<32x32xf32>
    %c0_1 = arith.constant 0 : index
    %c0_2 = arith.constant 0 : index
    %1 = vector.load %arg1[%c0_1, %c0_2] : memref<16x32xf32, #tpu.memory_space<vmem>>, vector<16x32xf32>
    %cst = arith.constant dense<0.000000e+00> : vector<16x32xf32>
    %2 = tpu.matmul %1, %0, %cst {dimension_numbers = #tpu.dot_dimension_numbers<[1], [0], [0], [1], [0, 0, 1, 1], [], []>} : vector<16x32xf32>, vector<32x32xf32>, vector<16x32xf32> -> vector<16x32xf32>
    %c0_3 = arith.constant 0 : index
    %c0_4 = arith.constant 0 : index
    %3 = vector.load %arg3[%c0_3, %c0_4] : memref<1x32xf32, #tpu.memory_space<vmem>>, vector<1x32xf32>
    %4 = vector.broadcast %3 : vector<1x32xf32> to vector<16x32xf32>
    %5 = arith.addf %2, %4 : vector<16x32xf32>
    %cst_5 = arith.constant 0.000000e+00 : f32
    %6 = vector.broadcast %cst_5 : f32 to vector<16x32xf32>
    %7 = arith.maximumf %5, %6 : vector<16x32xf32>
    %c0_6 = arith.constant 0 : index
    %c0_7 = arith.constant 0 : index
    %8 = vector.load %arg4[%c0_6, %c0_7] : memref<32x128xf32, #tpu.memory_space<vmem>>, vector<32x128xf32>
    %cst_8 = arith.constant dense<0.000000e+00> : vector<16x128xf32>
    %9 = tpu.matmul %7, %8, %cst_8 {dimension_numbers = #tpu.dot_dimension_numbers<[1], [0], [0], [1], [0, 0, 1, 1], [], []>} : vector<16x32xf32>, vector<32x128xf32>, vector<16x128xf32> -> vector<16x128xf32>
    %c0_9 = arith.constant 0 : index
    %c0_10 = arith.constant 0 : index
    %10 = vector.load %arg5[%c0_9, %c0_10] : memref<1x128xf32, #tpu.memory_space<vmem>>, vector<1x128xf32>
    %11 = vector.broadcast %10 : vector<1x128xf32> to vector<16x128xf32>
    %12 = arith.addf %9, %11 : vector<16x128xf32>
    %c0_11 = arith.constant 0 : index
    %c0_12 = arith.constant 0 : index
    %13 = vector.load %arg6[%c0_11, %c0_12] : memref<16x128xf32, #tpu.memory_space<vmem>>, vector<16x128xf32>
    tpu.vector_store %arg6[%c0_11, %c0_12], %12 {strides = array<i32>} : memref<16x128xf32, #tpu.memory_space<vmem>>, vector<16x128xf32>,
    return
  }
  func.func @transform_0(%arg0: i32) -> (i32, i32) {
    %c0_i32 = arith.constant 0 : i32
    %c0_i32_0 = arith.constant 0 : i32
    return %arg0, %c0_i32 : i32, i32
  }
  func.func @transform_1(%arg0: i32) -> (i32, i32) {
    %c0_i32 = arith.constant 0 : i32
    %c0_i32_0 = arith.constant 0 : i32
    %c0_i32_1 = arith.constant 0 : i32
    return %c0_i32, %c0_i32_0 : i32, i32
  }
  func.func @transform_2(%arg0: i32) -> (i32, i32) {
    %c0_i32 = arith.constant 0 : i32
    %c0_i32_0 = arith.constant 0 : i32
    %c0_i32_1 = arith.constant 0 : i32
    return %c0_i32, %c0_i32_0 : i32, i32
  }
  func.func @transform_3(%arg0: i32) -> (i32, i32) {
    %c0_i32 = arith.constant 0 : i32
    %c0_i32_0 = arith.constant 0 : i32
    %c0_i32_1 = arith.constant 0 : i32
    return %c0_i32, %c0_i32_0 : i32, i32
  }
  func.func @transform_4(%arg0: i32) -> (i32, i32) {
    %c0_i32 = arith.constant 0 : i32
    %c0_i32_0 = arith.constant 0 : i32
    %c0_i32_1 = arith.constant 0 : i32
    return %c0_i32, %c0_i32_0 : i32, i32
  }
  func.func @transform_5(%arg0: i32) -> (i32, i32) {
    %c0_i32 = arith.constant 0 : i32
    %c0_i32_0 = arith.constant 0 : i32
    return %arg0, %c0_i32 : i32, i32
  }
}

</mosaic_0001>

<llo_original>
// kernel: skill_policy_forward.1
$region0: #{skill_policy_forward.1}
  #allocation0 [shape = 'u32[]', space=smem, size = 0x4, offset = 0x4, fixed_abs, tag = 'smem constant byte address 0x4 - core index']
  #allocation1 [shape = 'u32[72,128]{1,0:T(1,128)}', space=vmem, size = 0x9000, scoped, tag = 'internal scratch']
  %s0 = inlined_call_operand.vmem [shape: f32[16,32], index: 0, kind: input, shape index: {}]
  %s1 = inlined_call_operand.vmem [shape: f32[32,32], index: 1, kind: input, shape index: {}]
  %s2 = inlined_call_operand.vmem [shape: f32[1,32], index: 2, kind: input, shape index: {}]
  %s3 = inlined_call_operand.vmem [shape: f32[32,128], index: 3, kind: input, shape index: {}]
  %s4 = inlined_call_operand.vmem [shape: f32[1,128], index: 4, kind: input, shape index: {}]
  %s5 = inlined_call_operand.vmem [shape: f32[16,128], index: 5, kind: output, shape index: {}]
  %s6 = sld [smem:[#allocation0]]
  $region30: #{skill_policy_forward.1} parent=0
    _
  %s8 = ssub.s32 1, %s6
  %s9 = scalar_select 0, %s8, %s6
  // Predicated region
  $region2: #{skill_policy_forward.1} parent=0 // pred_check
    _
  $region3: #{skill_policy_forward.1} parent=0 // pred_check_branch
    %11 = sbr.rel (0) target = $region5
  $region4: #{skill_policy_forward.1} parent=0 // pred_region
    _
  $region5: #{skill_policy_forward.1} parent=0 // pred_fallthru
    _
  // Predicated region
  $region6: #{skill_policy_forward.1} parent=0 // pred_check
    _
  $region7: #{skill_policy_forward.1} parent=0 // pred_check_branch
    %13 = sbr.rel (0) target = $region9
  $region8: #{skill_policy_forward.1} parent=0 // pred_region
    _
  $region9: #{skill_policy_forward.1} parent=0 // pred_fallthru
    _
  // Predicated region
  $region10: #{skill_policy_forward.1} parent=0 // pred_check
    _
  $region11: #{skill_policy_forward.1} parent=0 // pred_check_branch
    %15 = sbr.rel (0) target = $region13
  $region12: #{skill_policy_forward.1} parent=0 // pred_region
    _
  $region13: #{skill_policy_forward.1} parent=0 // pred_fallthru
    _
  // Predicated region
  $region14: #{skill_policy_forward.1} parent=0 // pred_check
    _
  $region15: #{skill_policy_forward.1} parent=0 // pred_check_branch
    %17 = sbr.rel (0) target = $region17
  $region16: #{skill_policy_forward.1} parent=0 // pred_region
    _
  $region17: #{skill_policy_forward.1} parent=0 // pred_fallthru
    _
  // Predicated region
  $region18: #{skill_policy_forward.1} parent=0 // pred_check
    _
  $region19: #{skill_policy_forward.1} parent=0 // pred_check_branch
    %19 = sbr.rel (0) target = $region21
  $region20: #{skill_policy_forward.1} parent=0 // pred_region
    _
  $region21: #{skill_policy_forward.1} parent=0 // pred_fallthru
    _
  %v20 = vld [vmem:[%s1] sm:$0xff]
  %v21 = vld [vmem:[%s1 + $0x8] sm:$0xff]
  %v22 = vld [vmem:[%s1 + $0x10] sm:$0xff]
  %v23 = vld [vmem:[%s1 + $0x18] sm:$0xff]
  %v24 = vld [vmem:[%s0] sm:$0xff]
  %v25 = vld [vmem:[%s0 + $0x8] sm:$0xff]
  %v26 = vld [vmem:[%s2] sm:$0x1]
  %v28 = vperm.slane %v26, 0
  %vm30 = vcmask 261120
  %v32 = vsel %vm30, %v24, 0
  %v35 = vsel %vm30, %v25, 0
  %37 = vmatpush.msra.mxu0 0.0
  %38 = vmatpush.msra.mxu0 0.0
  %39 = vmatpush.msra.mxu0 0.0
  %40 = vmatpush.msra.mxu0 0.0
  %41 = vmatpush.msra.mxu0 0.0
  %42 = vmatpush.msra.mxu0 0.0
  %43 = vmatpush.msra.mxu0 0.0
  %44 = vmatpush.msra.mxu0 0.0
  %45 = vmatpush.msra.mxu0 0.0
  %46 = vmatpush.msra.mxu0 0.0
  %47 = vmatpush.msra.mxu0 0.0
  %48 = vmatpush.msra.mxu0 0.0
  %49 = vmatpush.msra.mxu0 %v23
  %50 = vmatpush.msra.mxu0 %v22
  %51 = vmatpush.msra.mxu0 %v21
  %52 = vmatpush.msra.mxu0 %v20
  %53 = vmatmul.f32.gmra.mxu0 %v32
  %v54 = vpop.f32.mrf.mxu0
  %v55 = vadd.f32 %v28, %v54
  %56 = vmatmul.f32.gmra.mxu0 %v35
  %v57 = vpop.f32.mrf.mxu0
  %v58 = vadd.f32 %v28, %v57
  %59 = vdwg.mxu0
  %v60 = vmax.f32 %v55, 0.0
  %v61 = vmax.f32 %v58, 0.0
  %v62 = vld [vmem:[%s3] sm:$0xff]
  %v63 = vld [vmem:[%s3 + $0x8] sm:$0xff]
  %v64 = vld [vmem:[%s3 + $0x10] sm:$0xff]
  %v65 = vld [vmem:[%s3 + $0x18] sm:$0xff]
  %v66 = vld [vmem:[%s4] sm:$0x1]
  %v68 = vperm.slane %v66, 0
  %v71 = vsel %vm30, %v60, 0
  %v74 = vsel %vm30, %v61, 0
  %76 = vmatpush.msra.mxu0 0.0
  %77 = vmatpush.msra.mxu0 0.0
  %78 = vmatpush.msra.mxu0 0.0
  %79 = vmatpush.msra.mxu0 0.0
  %80 = vmatpush.msra.mxu0 0.0
  %81 = vmatpush.msra.mxu0 0.0
  %82 = vmatpush.msra.mxu0 0.0
  %83 = vmatpush.msra.mxu0 0.0
  %84 = vmatpush.msra.mxu0 0.0
  %85 = vmatpush.msra.mxu0 0.0
  %86 = vmatpush.msra.mxu0 0.0
  %87 = vmatpush.msra.mxu0 0.0
  %88 = vmatpush.msra.mxu0 %v65
  %89 = vmatpush.msra.mxu0 %v64
  %90 = vmatpush.msra.mxu0 %v63
  %91 = vmatpush.msra.mxu0 %v62
  %92 = vmatmul.f32.gmra.mxu0 %v71
  %v93 = vpop.f32.mrf.mxu0
  %v94 = vadd.f32 %v68, %v93
  %95 = vmatmul.f32.gmra.mxu0 %v74
  %v96 = vpop.f32.mrf.mxu0
  %v97 = vadd.f32 %v68, %v96
  %98 = vdwg.mxu0
  %99 = vst [vmem:[%s5] sm:$0xff] %v94
  %100 = vst [vmem:[%s5 + $0x8] sm:$0xff] %v97
  // Predicated region
  $region22: #{skill_policy_forward.1} parent=0 // pred_check
    _
  $region23: #{skill_policy_forward.1} parent=0 // pred_check_branch
    %102 = sbr.rel (0) target = $region25
  $region24: #{skill_policy_forward.1} parent=0 // pred_region
    _
  $region25: #{skill_policy_forward.1} parent=0 // pred_fallthru
    _
  // Predicated region
  $region26: #{skill_policy_forward.1} parent=0 // pred_check
    _
  $region27: #{skill_policy_forward.1} parent=0 // pred_check_branch
    %104 = sbr.rel (0) target = $region29
  $region28: #{skill_policy_forward.1} parent=0 // pred_region
    _
  $region29: #{skill_policy_forward.1} parent=0 // pred_fallthru
    _

</llo_original>
